<compile_context>
chip_gen: v6e
topology: v6e:2x2x1
jax: 0.10.0
libtpu: 0.0.40
codegen_flags: <defaults>
</compile_context>

<pallas_src>
import functools

import jax
import jax.numpy as jnp
from jax.experimental import pallas as pl
from jax.experimental.pallas import tpu as pltpu


def _contour_block_kernel(pred_ref, target_ref, len_ref, reg_ref, *,
                          use_roll: bool, unroll: bool):
    """One grid step: partial sums (length, region) over one (bc_tile, H, W) block."""
    bc_tile, H, W = pred_ref.shape

    reg_init = jnp.zeros((H, W), jnp.float32)
    if use_roll:
        len_init = jnp.zeros((H, W), jnp.float32)
    else:
        len_init = jnp.zeros((H - 2, W - 2), jnp.float32)

    def body(i, carry):
        len_acc, reg_acc = carry
        p = pred_ref[i].astype(jnp.float32)    # (H, W) — f32 upcast in-vreg
        t = target_ref[i].astype(jnp.float32)  # (H, W)

        # Fused region integrand: pred*(target-1)^2 + (1-pred)*target^2
        tm1 = t - 1.0
        reg_acc = reg_acc + (p * (tm1 * tm1) + (1.0 - p) * (t * t))

        if use_roll:
            # out[r, c] = p[(r+k) % H, c] / p[r, (c+k) % W]; the wrap-around
            # rows/cols are masked off after the loop.  Rolls run on the XLU,
            # freeing vld/vst + VALU slots vs. materialized off-tile slices.
            p_h1 = pltpu.roll(p, H - 1, 0)   # p[r+1, c]
            p_h2 = pltpu.roll(p, H - 2, 0)   # p[r+2, c]
            p_w1 = pltpu.roll(p, W - 1, 1)   # p[r, c+1]
            p_w2 = pltpu.roll(p, W - 2, 1)   # p[r, c+2]
            dr = p_h2 - p_h1
            dc = p_w2 - p_w1
        else:
            # Exact PyTorch slicing (fallback for non vreg-aligned H/W):
            #   delta_r[:, 1:, :-2] == p[2:H, 0:W-2] - p[1:H-1, 0:W-2]
            #   delta_c[:, :-2, 1:] == p[0:H-2, 2:W] - p[0:H-2, 1:W-1]
            dr = p[2:H, 0:W - 2] - p[1:H - 1, 0:W - 2]
            dc = p[0:H - 2, 2:W] - p[0:H - 2, 1:W - 1]

        # abs() dropped: dr*dr + dc*dc is already non-negative.  sqrt -> EUP.
        len_acc = len_acc + jnp.sqrt(dr * dr + dc * dc + 1e-8)
        return len_acc, reg_acc

    len_acc, reg_acc = jax.lax.fori_loop(
        0, bc_tile, body, (len_init, reg_init), unroll=unroll)

    region_sum = jnp.sum(reg_acc)
    if use_roll:
        row = jax.lax.broadcasted_iota(jnp.int32, (H, W), 0)
        col = jax.lax.broadcasted_iota(jnp.int32, (H, W), 1)
        valid = (row < H - 2) & (col < W - 2)
        length_sum = jnp.sum(jnp.where(valid, len_acc, 0.0))
    else:
        length_sum = jnp.sum(len_acc)

    # Lane-dense (1, 1, 128) partial-sum blocks (unmasked stores); the wrapper
    # only reads element [., 0, 0].
    len_ref[...] = jnp.full(len_ref.shape, length_sum, dtype=jnp.float32)
    reg_ref[...] = jnp.full(reg_ref.shape, region_sum, dtype=jnp.float32)


def make_contour_loss(weight: float = 10.0,
                      tile_budget_bytes: int = 1 * 1024 * 1024):
    """Returns a callable (pred, target) -> scalar loss matching ContourLoss.forward."""

    def contour_loss(pred, target):
        B, C, H, W = pred.shape
        BC = B * C
        p = pred.reshape(BC, H, W)
        t = target.reshape(BC, H, W)

        itemsize = jnp.dtype(pred.dtype).itemsize
        slab_bytes = H * W * itemsize

        # Largest divisor of B*C whose (bc_tile, H, W) block fits the budget,
        # preferring num_blocks >= 8 (then >= 2) so the parallel grid axis can
        # shard across both v7x TensorCores (single TC on v5e/v6e: no cost).
        bc_tile = 1
        for min_blocks in (8, 2, 1):
            cands = [d for d in range(1, BC + 1)
                     if BC % d == 0
                     and d * slab_bytes <= tile_budget_bytes
                     and BC // d >= min_blocks]
            if cands:
                bc_tile = max(cands)
                break
        num_blocks = BC // bc_tile
        # TODO(synk): add an H-tiled path (2-row halo) for single images whose
        # (1, H, W) slab alone exceeds the VMEM budget; currently such shapes
        # just rely on the raised vmem_limit_bytes below.

        use_roll = (H % 8 == 0) and (W % 128 == 0)
        unroll = bc_tile <= 8

        # Explicit VMEM accounting: 2 inputs x 2 pipeline buffers of the raw
        # block, ~a dozen (H, W) f32 temporaries live inside one loop
        # iteration, plus the tiny partial-sum output buffers.
        est_bytes = (4 * bc_tile * slab_bytes
                     + 14 * H * W * 4
                     + 2 * 2 * 128 * 4)
        vmem_limit = int(min(max(2 * est_bytes, 32 * 1024 * 1024),
                             48 * 1024 * 1024))

        kernel = functools.partial(_contour_block_kernel,
                                   use_roll=use_roll, unroll=unroll)

        grid_spec = pltpu.PrefetchScalarGridSpec(
            num_scalar_prefetch=0,
            grid=(num_blocks,),
            in_specs=[
                pl.BlockSpec((bc_tile, H, W), lambda i: (i, 0, 0)),
                pl.BlockSpec((bc_tile, H, W), lambda i: (i, 0, 0)),
            ],
            out_specs=[
                pl.BlockSpec((1, 1, 128), lambda i: (i, 0, 0)),
                pl.BlockSpec((1, 1, 128), lambda i: (i, 0, 0)),
            ],
        )

        len_part, reg_part = pl.pallas_call(
            kernel,
            grid_spec=grid_spec,
            out_shape=(
                jax.ShapeDtypeStruct((num_blocks, 1, 128), jnp.float32),
                jax.ShapeDtypeStruct((num_blocks, 1, 128), jnp.float32),
            ),
            compiler_params=pltpu.CompilerParams(
                dimension_semantics=("parallel",),
                vmem_limit_bytes=vmem_limit,
            ),
        )(p, t)

        # Final combine in plain JAX, using GLOBAL element counts
        # (exactly matches torch.mean over the full tensors).
        n_length = BC * (H - 2) * (W - 2)
        n_region = BC * H * W
        length = jnp.sum(len_part[:, 0, 0]) / n_length
        region = jnp.sum(reg_part[:, 0, 0]) / n_region
        return jnp.float32(weight) * length + region

    return contour_loss


def contour_loss_ref(pred, target, weight=10.0):
    """Pure-JAX reference, mirrors the PyTorch module exactly."""
    pred = pred.astype(jnp.float32)
    target = target.astype(jnp.float32)
    delta_r = pred[:, :, 1:, :] - pred[:, :, :-1, :]
    delta_c = pred[:, :, :, 1:] - pred[:, :, :, :-1]
    delta_r = delta_r[:, :, 1:, :-2] ** 2
    delta_c = delta_c[:, :, :-2, 1:] ** 2
    delta_pred = jnp.abs(delta_r + delta_c)
    length = jnp.mean(jnp.sqrt(delta_pred + 1e-08))
    region_in = jnp.mean(pred * (target - 1.0) ** 2)
    region_out = jnp.mean((1.0 - pred) * target ** 2)
    return weight * length + region_in + region_out


if __name__ == "__main__":
    key = jax.random.PRNGKey(0)
    k1, k2, k3, k4 = jax.random.split(key, 4)

    loss_fn = jax.jit(make_contour_loss(weight=10.0))

    # 1) vreg-aligned spatial dims -> pltpu.roll fast path, 8-step parallel grid.
    B, C, H, W = 2, 4, 128, 128
    pred = jax.nn.sigmoid(jax.random.normal(k1, (B, C, H, W), dtype=jnp.float32))
    target = (jax.random.uniform(k2, (B, C, H, W)) > 0.5).astype(jnp.float32)
    loss = loss_fn(pred, target)
    jax.block_until_ready(loss)
    ref = contour_loss_ref(pred, target, 10.0)
    assert jnp.allclose(loss, ref, rtol=1e-4, atol=1e-6), (loss, ref)

    # 2) small non-aligned spatial dims -> exact static-slice fallback path.
    Bs, Cs, Hs, Ws = 2, 4, 16, 16
    pred_s = jax.nn.sigmoid(jax.random.normal(k3, (Bs, Cs, Hs, Ws), dtype=jnp.float32))
    target_s = (jax.random.uniform(k4, (Bs, Cs, Hs, Ws)) > 0.5).astype(jnp.float32)
    loss_s = loss_fn(pred_s, target_s)
    jax.block_until_ready(loss_s)
    ref_s = contour_loss_ref(pred_s, target_s, 10.0)
    assert jnp.allclose(loss_s, ref_s, rtol=1e-4, atol=1e-6), (loss_s, ref_s)

    # 3) bf16 inputs (half the HBM bytes); kernel upcasts to f32 in-vreg.
    pred_bf = pred.astype(jnp.bfloat16)
    target_bf = target.astype(jnp.bfloat16)
    loss_bf = loss_fn(pred_bf, target_bf)
    jax.block_until_ready(loss_bf)
    ref_bf = contour_loss_ref(pred_bf, target_bf, 10.0)
    assert jnp.allclose(loss_bf, ref_bf, rtol=1e-4, atol=1e-5), (loss_bf, ref_bf)

    # 4) bc_tile > 1 -> exercises the in-kernel fori_loop over 2 images/block.
    Bm, Cm, Hm, Wm = 2, 8, 32, 128
    pred_m = jax.nn.sigmoid(jax.random.normal(k1, (Bm, Cm, Hm, Wm), dtype=jnp.float32))
    target_m = (jax.random.uniform(k2, (Bm, Cm, Hm, Wm)) > 0.5).astype(jnp.float32)
    loss_m = loss_fn(pred_m, target_m)
    jax.block_until_ready(loss_m)
    ref_m = contour_loss_ref(pred_m, target_m, 10.0)
    assert jnp.allclose(loss_m, ref_m, rtol=1e-4, atol=1e-6), (loss_m, ref_m)

    print("KERNEL_OK")
</pallas_src>

<mosaic_0001>
module attributes {stable_mosaic.version = 11 : i64} {
  func.func @_contour_block_kernel(%arg0: i32, %arg1: memref<1x128x128xf32, #tpu.memory_space<vmem>>, %arg2: memref<1x128x128xf32, #tpu.memory_space<vmem>>, %arg3: memref<1x1x128xf32, #tpu.memory_space<vmem>>, %arg4: memref<1x1x128xf32, #tpu.memory_space<vmem>>) attributes {dimension_semantics = [#tpu.dimension_semantics<parallel>], iteration_bounds = array<i64: 8>, scalar_prefetch = 0 : i64, scratch_operands = 0 : i64, tpu.core_type = #tpu.core_type<tc>, window_params = [{transform_indices = @transform_0, window_bounds = array<i64: 1, 128, 128>}, {transform_indices = @transform_1, window_bounds = array<i64: 1, 128, 128>}, {transform_indices = @transform_2, window_bounds = array<i64: 1, 1, 128>}, {transform_indices = @transform_3, window_bounds = array<i64: 1, 1, 128>}]} {
    %cst = arith.constant 0.000000e+00 : f32
    %0 = vector.broadcast %cst : f32 to vector<128x128xf32>
    %cst_0 = arith.constant 0.000000e+00 : f32
    %1 = vector.broadcast %cst_0 : f32 to vector<128x128xf32>
    %c0_i32 = arith.constant 0 : i32
    %2 = arith.index_cast %c0_i32 : i32 to index
    %c0 = arith.constant 0 : index
    %c0_1 = arith.constant 0 : index
    %3 = vector.load %arg1[%2, %c0, %c0_1] : memref<1x128x128xf32, #tpu.memory_space<vmem>>, vector<1x128x128xf32>
    %4 = vector.shape_cast %3 : vector<1x128x128xf32> to vector<128x128xf32>
    %5 = arith.index_cast %c0_i32 : i32 to index
    %c0_2 = arith.constant 0 : index
    %c0_3 = arith.constant 0 : index
    %6 = vector.load %arg2[%5, %c0_2, %c0_3] : memref<1x128x128xf32, #tpu.memory_space<vmem>>, vector<1x128x128xf32>
    %7 = vector.shape_cast %6 : vector<1x128x128xf32> to vector<128x128xf32>
    %cst_4 = arith.constant 1.000000e+00 : f32
    %8 = vector.broadcast %cst_4 : f32 to vector<128x128xf32>
    %9 = arith.subf %7, %8 : vector<128x128xf32>
    %10 = arith.mulf %9, %9 : vector<128x128xf32>
    %11 = arith.mulf %4, %10 : vector<128x128xf32>
    %cst_5 = arith.constant 1.000000e+00 : f32
    %12 = vector.broadcast %cst_5 : f32 to vector<128x128xf32>
    %13 = arith.subf %12, %4 : vector<128x128xf32>
    %14 = arith.mulf %7, %7 : vector<128x128xf32>
    %15 = arith.mulf %13, %14 : vector<128x128xf32>
    %16 = arith.addf %11, %15 : vector<128x128xf32>
    %17 = arith.addf %0, %16 : vector<128x128xf32>
    %c127_i32 = arith.constant 127 : i32
    %18 = tpu.dynamic_rotate %4 by %c127_i32 dim 0 : vector<128x128xf32>, i32 -> vector<128x128xf32>
    %c126_i32 = arith.constant 126 : i32
    %19 = tpu.dynamic_rotate %4 by %c126_i32 dim 0 : vector<128x128xf32>, i32 -> vector<128x128xf32>
    %c127_i32_6 = arith.constant 127 : i32
    %20 = tpu.dynamic_rotate %4 by %c127_i32_6 dim 1 : vector<128x128xf32>, i32 -> vector<128x128xf32>
    %c126_i32_7 = arith.constant 126 : i32
    %21 = tpu.dynamic_rotate %4 by %c126_i32_7 dim 1 : vector<128x128xf32>, i32 -> vector<128x128xf32>
    %22 = arith.subf %19, %18 : vector<128x128xf32>
    %23 = arith.subf %21, %20 : vector<128x128xf32>
    %24 = arith.mulf %22, %22 : vector<128x128xf32>
    %25 = arith.mulf %23, %23 : vector<128x128xf32>
    %26 = arith.addf %24, %25 : vector<128x128xf32>
    %cst_8 = arith.constant 9.99999993E-9 : f32
    %27 = vector.broadcast %cst_8 : f32 to vector<128x128xf32>
    %28 = arith.addf %26, %27 : vector<128x128xf32>
    %29 = math.sqrt %28 : vector<128x128xf32>
    %30 = arith.addf %1, %29 : vector<128x128xf32>
    %c1_i32 = arith.constant 1 : i32
    %31 = vector.shape_cast %17 : vector<128x128xf32> to vector<1x128x128xf32>
    %cst_9 = arith.constant dense<0.000000e+00> : vector<1xf32>
    %32 = vector.multi_reduction <add>, %31, %cst_9 [1, 2] : vector<1x128x128xf32> to vector<1xf32>
    %33 = vector.shape_cast %32 : vector<1xf32> to vector<1x1x1xf32>
    %34 = vector.extract %33[0, 0, 0] : f32 from vector<1x1x1xf32>
    %35 = tpu.iota {dimensions = array<i32: 0>} : vector<128x128xi32>
    %36 = tpu.iota {dimensions = array<i32: 1>} : vector<128x128xi32>
    %c126_i32_10 = arith.constant 126 : i32
    %37 = vector.broadcast %c126_i32_10 : i32 to vector<128x128xi32>
    %38 = arith.cmpi slt, %35, %37 : vector<128x128xi32>
    %c126_i32_11 = arith.constant 126 : i32
    %39 = vector.broadcast %c126_i32_11 : i32 to vector<128x128xi32>
    %40 = arith.cmpi slt, %36, %39 : vector<128x128xi32>
    %41 = arith.andi %38, %40 : vector<128x128xi1>
    %cst_12 = arith.constant 0.000000e+00 : f32
    %42 = vector.broadcast %cst_12 : f32 to vector<128x128xf32>
    %43 = arith.select %41, %30, %42 : vector<128x128xi1>, vector<128x128xf32>
    %44 = vector.shape_cast %43 : vector<128x128xf32> to vector<1x128x128xf32>
    %cst_13 = arith.constant dense<0.000000e+00> : vector<1xf32>
    %45 = vector.multi_reduction <add>, %44, %cst_13 [1, 2] : vector<1x128x128xf32> to vector<1xf32>
    %46 = vector.shape_cast %45 : vector<1xf32> to vector<1x1x1xf32>
    %47 = vector.extract %46[0, 0, 0] : f32 from vector<1x1x1xf32>
    %48 = vector.broadcast %47 : f32 to vector<1x1x128xf32>
    %c0_14 = arith.constant 0 : index
    %c0_15 = arith.constant 0 : index
    %c0_16 = arith.constant 0 : index
    %49 = vector.load %arg3[%c0_14, %c0_15, %c0_16] : memref<1x1x128xf32, #tpu.memory_space<vmem>>, vector<1x1x128xf32>
    tpu.vector_store %arg3[%c0_14, %c0_15, %c0_16], %48 {strides = array<i32>} : memref<1x1x128xf32, #tpu.memory_space<vmem>>, vector<1x1x128xf32>,
    %50 = vector.broadcast %34 : f32 to vector<1x1x128xf32>
    %c0_17 = arith.constant 0 : index
    %c0_18 = arith.constant 0 : index
    %c0_19 = arith.constant 0 : index
    %51 = vector.load %arg4[%c0_17, %c0_18, %c0_19] : memref<1x1x128xf32, #tpu.memory_space<vmem>>, vector<1x1x128xf32>
    tpu.vector_store %arg4[%c0_17, %c0_18, %c0_19], %50 {strides = array<i32>} : memref<1x1x128xf32, #tpu.memory_space<vmem>>, vector<1x1x128xf32>,
    return
  }
  func.func @transform_0(%arg0: i32) -> (i32, i32, i32) {
    %c0_i32 = arith.constant 0 : i32
    %c0_i32_0 = arith.constant 0 : i32
    %c0_i32_1 = arith.constant 0 : i32
    return %arg0, %c0_i32, %c0_i32_0 : i32, i32, i32
  }
  func.func @transform_1(%arg0: i32) -> (i32, i32, i32) {
    %c0_i32 = arith.constant 0 : i32
    %c0_i32_0 = arith.constant 0 : i32
    %c0_i32_1 = arith.constant 0 : i32
    return %arg0, %c0_i32, %c0_i32_0 : i32, i32, i32
  }
  func.func @transform_2(%arg0: i32) -> (i32, i32, i32) {
    %c0_i32 = arith.constant 0 : i32
    %c0_i32_0 = arith.constant 0 : i32
    %c0_i32_1 = arith.constant 0 : i32
    return %arg0, %c0_i32, %c0_i32_0 : i32, i32, i32
  }
  func.func @transform_3(%arg0: i32) -> (i32, i32, i32) {
    %c0_i32 = arith.constant 0 : i32
    %c0_i32_0 = arith.constant 0 : i32
    %c0_i32_1 = arith.constant 0 : i32
    return %arg0, %c0_i32, %c0_i32_0 : i32, i32, i32
  }
}

</mosaic_0001>

<llo_original>
// kernel: contour_loss.1
$region0: #{contour_loss.1}
  #allocation0 [shape = 'u32[]', space=smem, size = 0x4, offset = 0x4, fixed_abs, tag = 'smem constant byte address 0x4 - core index']
  #allocation1 [shape = 'u32[144,128]{1,0:T(1,128)}', space=vmem, size = 0x12000, scoped, tag = 'internal scratch']
  %s0 = inlined_call_operand.hbm [shape: f32[8,128,128], index: 0, kind: input, shape index: {}]
  %s1 = inlined_call_operand.hbm [shape: f32[8,128,128], index: 1, kind: input, shape index: {}]
  %s2 = inlined_call_operand.vmem [shape: f32[8,1,128], index: 2, kind: output, shape index: {0}]
  %s3 = inlined_call_operand.vmem [shape: f32[8,1,128], index: 3, kind: output, shape index: {1}]
  %4 = xla_tuple %s2, %s3
  %s5 = sld [smem:[#allocation0]]
  $region57: #{contour_loss.1} parent=0
    _
  %s7 = ssub.s32 1, %s5
  %s8 = scalar_select 0, %s7, %s5
  $region1: #{contour_loss.1} parent=0
    #allocation2 [shape = 'u8[131072]{0}', space=vmem, size = 0x20000, scoped, tag = 'input window, operand 0']
    #allocation3 [shape = 's32[2]{0}', space=sflag, size = 0x8, scoped, tag = 'scoped memory for contour_loss.1']
    #allocation4 [shape = 'u8[131072]{0}', space=vmem, size = 0x20000, scoped, tag = 'input window, operand 1']
    #allocation5 [shape = 's32[2]{0}', space=sflag, size = 0x8, scoped, tag = 'scoped memory for contour_loss.1']
    %9 = vsyncpa [#allocation3], 0
    %s10 = scalar_lea.sflag [#allocation3], 1
    %11 = vsyncpa %s10, 0
    %12 = vsyncpa [#allocation5], 0
    %s13 = scalar_lea.sflag [#allocation5], 1
    %14 = vsyncpa %s13, 0
    loop: start=0, step=1, limit=10
    $region2: #{contour_loss.1} parent=1 // loop_pre_header
      _
    $region3: #{contour_loss.1} parent=1 // loop_header
      %s16 = sphi 0, %s20
      %p17 = scmp.ge.s32.totalorder %s16, 10
      %s26 = sphi 0, %s28
      %s29 = sphi 0, %s26
      %s30 = sphi 0, %s29
      %s46 = sphi 0, %s30
      %s52 = sphi 0, %s54
      %s55 = sphi 0, %s52
      %s56 = sphi 0, %s55
      %s72 = sphi 0, %s56
      %s78 = sphi 0, %s80
      %s81 = sphi 0, %s78
      %s82 = sphi 0, %s81
      %s98 = sphi 0, %s82
      %s104 = sphi 0, %s106
      %s107 = sphi 0, %s104
      %s108 = sphi 0, %s107
      %s124 = sphi 0, %s108
    $region4: #{contour_loss.1} parent=1 // loop_header_branch
      %19 = sbr.rel (%p17) target = $region8
    $region5: #{contour_loss.1} parent=1 // loop_body
      %s21 = ssub.s32 %s16, 1
      %s22 = ssub.s32 %s16, 2
      %s23 = sadd.s32 %s16, 1
      %s24 = ssub.s32 %s16, %s23
      %p25 = scmp.eq.s32.totalorder %s24, 0
      %s27 = sadd.s32 %s26, 1
      %s28 = scalar_select %p25, %s26, %s27
      %p31 = pneg %p25
      %p32 = scmp.eq.s32.totalorder %s16, 7
      %p33 = por %p31, %p32
      %p34 = scmp.ne.s32.totalorder %s26, %s29
      %p35 = scmp.eq.s32.totalorder %s16, 0
      %p36 = por %p34, %p35
      %p37 = scmp.ne.s32.totalorder %s26, %s29
      %p38 = scmp.eq.s32.totalorder %s21, 7
      %p39 = por %p37, %p38
      %p40 = scmp.ne.s32.totalorder %s29, %s30
      %p41 = scmp.eq.s32.totalorder %s21, 0
      %p42 = por %p40, %p41
      %p43 = scmp.ne.s32.totalorder %s29, %s30
      %p44 = scmp.eq.s32.totalorder %s22, 7
      %p45 = por %p43, %p44
      %p47 = scmp.ne.s32.totalorder %s30, %s46
      %p48 = scmp.eq.s32.totalorder %s22, 0
      %p49 = por %p47, %p48
      %s50 = ssub.s32 %s16, %s23
      %p51 = scmp.eq.s32.totalorder %s50, 0
      %s53 = sadd.s32 %s52, 1
      %s54 = scalar_select %p51, %s52, %s53
      %p57 = pneg %p51
      %p58 = scmp.eq.s32.totalorder %s16, 7
      %p59 = por %p57, %p58
      %p60 = scmp.ne.s32.totalorder %s52, %s55
      %p61 = scmp.eq.s32.totalorder %s16, 0
      %p62 = por %p60, %p61
      %p63 = scmp.ne.s32.totalorder %s52, %s55
      %p64 = scmp.eq.s32.totalorder %s21, 7
      %p65 = por %p63, %p64
      %p66 = scmp.ne.s32.totalorder %s55, %s56
      %p67 = scmp.eq.s32.totalorder %s21, 0
      %p68 = por %p66, %p67
      %p69 = scmp.ne.s32.totalorder %s55, %s56
      %p70 = scmp.eq.s32.totalorder %s22, 7
      %p71 = por %p69, %p70
      %p73 = scmp.ne.s32.totalorder %s56, %s72
      %p74 = scmp.eq.s32.totalorder %s22, 0
      %p75 = por %p73, %p74
      %s76 = ssub.s32 %s16, %s23
      %p77 = scmp.eq.s32.totalorder %s76, 0
      %s79 = sadd.s32 %s78, 1
      %s80 = scalar_select %p77, %s78, %s79
      %p83 = pneg %p77
      %p84 = scmp.eq.s32.totalorder %s16, 7
      %p85 = por %p83, %p84
      %p86 = scmp.ne.s32.totalorder %s78, %s81
      %p87 = scmp.eq.s32.totalorder %s16, 0
      %p88 = por %p86, %p87
      %p89 = scmp.ne.s32.totalorder %s78, %s81
      %p90 = scmp.eq.s32.totalorder %s21, 7
      %p91 = por %p89, %p90
      %p92 = scmp.ne.s32.totalorder %s81, %s82
      %p93 = scmp.eq.s32.totalorder %s21, 0
      %p94 = por %p92, %p93
      %p95 = scmp.ne.s32.totalorder %s81, %s82
      %p96 = scmp.eq.s32.totalorder %s22, 7
      %p97 = por %p95, %p96
      %p99 = scmp.ne.s32.totalorder %s82, %s98
      %p100 = scmp.eq.s32.totalorder %s22, 0
      %p101 = por %p99, %p100
      %s102 = ssub.s32 %s16, %s23
      %p103 = scmp.eq.s32.totalorder %s102, 0
      %s105 = sadd.s32 %s104, 1
      %s106 = scalar_select %p103, %s104, %s105
      %p109 = pneg %p103
      %p110 = scmp.eq.s32.totalorder %s16, 7
      %p111 = por %p109, %p110
      %p112 = scmp.ne.s32.totalorder %s104, %s107
      %p113 = scmp.eq.s32.totalorder %s16, 0
      %p114 = por %p112, %p113
      %p115 = scmp.ne.s32.totalorder %s104, %s107
      %p116 = scmp.eq.s32.totalorder %s21, 7
      %p117 = por %p115, %p116
      %p118 = scmp.ne.s32.totalorder %s107, %s108
      %p119 = scmp.eq.s32.totalorder %s21, 0
      %p120 = por %p118, %p119
      %p121 = scmp.ne.s32.totalorder %s107, %s108
      %p122 = scmp.eq.s32.totalorder %s22, 7
      %p123 = por %p121, %p122
      %p125 = scmp.ne.s32.totalorder %s108, %s124
      %p126 = scmp.eq.s32.totalorder %s22, 0
      %p127 = por %p125, %p126
      %p128 = scmp.le.s32.totalorder 1, %s16
      %p129 = scmp.lt.s32.totalorder %s16, 9
      %p130 = pnand %p128, %p129
      %p131 = pneg %p130
      // Predicated region
      $region9: #{contour_loss.1} parent=5 // pred_check
        _
      $region10: #{contour_loss.1} parent=5 // pred_check_branch
        %133 = sbr.rel (%p130) target = $region12
      $region11: #{contour_loss.1} parent=5 // pred_region
        %s134 = ssub.s32 %s16, 1
      $region12: #{contour_loss.1} parent=5 // pred_fallthru
        _
      %p135 = scmp.lt.s32.totalorder %s16, 8
      // Predicated region
      $region13: #{contour_loss.1} parent=5 // pred_check
        %p136 = pneg %p135
      $region14: #{contour_loss.1} parent=5 // pred_check_branch
        %138 = sbr.rel (%p136) target = $region16
      $region15: #{contour_loss.1} parent=5 // pred_region
        // Predicated region
        $region17: #{contour_loss.1} parent=15 // pred_check
          %p139 = pneg %p36
        $region18: #{contour_loss.1} parent=15 // pred_check_branch
          %141 = sbr.rel (%p139) target = $region20
        $region19: #{contour_loss.1} parent=15 // pred_region
          %s142 = sand.u32 %s26, 1
          %s143 = scalar_lea.sflag [#allocation3], %s142
          %s144 = sand.u32 %s26, 1
          %s145 = smul.addr %s144, 128
          %s146 = scalar_lea.vmem [#allocation2], %s145
          %s148 = ssub.s32 2048, 2048
          %149 = vsyncadd %s143, %s148
          %s150 = smul.addr %s16, 16
          %s151 = smul.addr %s150, 128
          %s152 = scalar_lea.hbm %s0, %s151
          %s153 = sshll.u32 %s146, 4
          %s154 = int_to_ptr.vmem [resolvable:$true] %s153
          %159 = dma.hbm_to_vmem [thread:$0]  %s152, 2048, %s154, %s143, 128, 128, 8
        $region20: #{contour_loss.1} parent=15 // pred_fallthru
          _
        // Predicated region
        $region21: #{contour_loss.1} parent=15 // pred_check
          %p160 = pneg %p62
        $region22: #{contour_loss.1} parent=15 // pred_check_branch
          %162 = sbr.rel (%p160) target = $region24
        $region23: #{contour_loss.1} parent=15 // pred_region
          %s163 = sand.u32 %s52, 1
          %s164 = scalar_lea.sflag [#allocation5], %s163
          %s165 = sand.u32 %s52, 1
          %s166 = smul.addr %s165, 128
          %s167 = scalar_lea.vmem [#allocation4], %s166
          %s169 = ssub.s32 2048, 2048
          %170 = vsyncadd %s164, %s169
          %s171 = smul.addr %s16, 16
          %s172 = smul.addr %s171, 128
          %s173 = scalar_lea.hbm %s1, %s172
          %s174 = sshll.u32 %s167, 4
          %s175 = int_to_ptr.vmem [resolvable:$true] %s174
          %180 = dma.hbm_to_vmem [thread:$0]  %s173, 2048, %s175, %s164, 128, 128, 8
        $region24: #{contour_loss.1} parent=15 // pred_fallthru
          _
      $region16: #{contour_loss.1} parent=5 // pred_fallthru
        _
      %p181 = scmp.le.s32.totalorder 1, %s16
      %p182 = scmp.lt.s32.totalorder %s16, 9
      %p183 = pnand %p181, %p182
      %p184 = pneg %p183
      // Predicated region
      $region25: #{contour_loss.1} parent=5 // pred_check
        _
      $region26: #{contour_loss.1} parent=5 // pred_check_branch
        %186 = sbr.rel (%p183) target = $region28
      $region27: #{contour_loss.1} parent=5 // pred_region
        %s187 = ssub.s32 %s16, 1
        %s188 = sand.u32 %s29, 1
        %s189 = scalar_lea.sflag [#allocation3], %s188
        %s190 = sand.u32 %s29, 1
        %s191 = smul.addr %s190, 128
        %s192 = scalar_lea.vmem [#allocation2], %s191
        // Predicated region
        $region29: #{contour_loss.1} parent=27 // pred_check
          %p193 = pneg %p42
        $region30: #{contour_loss.1} parent=27 // pred_check_branch
          %195 = sbr.rel (%p193) target = $region32
        $region31: #{contour_loss.1} parent=27 // pred_region
          %196 = dma.done %s189, 2048
        $region32: #{contour_loss.1} parent=27 // pred_fallthru
          _
        %s197 = sand.u32 %s55, 1
        %s198 = scalar_lea.sflag [#allocation5], %s197
        %s199 = sand.u32 %s55, 1
        %s200 = smul.addr %s199, 128
        %s201 = scalar_lea.vmem [#allocation4], %s200
        // Predicated region
        $region33: #{contour_loss.1} parent=27 // pred_check
          %p202 = pneg %p68
        $region34: #{contour_loss.1} parent=27 // pred_check_branch
          %204 = sbr.rel (%p202) target = $region36
        $region35: #{contour_loss.1} parent=27 // pred_region
          %205 = dma.done %s198, 2048
        $region36: #{contour_loss.1} parent=27 // pred_fallthru
          _
        %s206 = sand.u32 %s29, 1
        %s207 = scalar_lea.sflag [#allocation3], %s206
        %s208 = sand.u32 %s29, 1
        %s209 = smul.addr %s208, 128
        %s210 = scalar_lea.vmem [#allocation2], %s209
        %p211 = pneg %p42
        %p212 = pneg %p39
        %s213 = sand.u32 %s55, 1
        %s214 = scalar_lea.sflag [#allocation5], %s213
        %s215 = sand.u32 %s55, 1
        %s216 = smul.addr %s215, 128
        %s217 = scalar_lea.vmem [#allocation4], %s216
        %p218 = pneg %p68
        %p219 = pneg %p65
        %p220 = pneg %p94
        %p221 = pneg %p91
        %p222 = scmp.lt.s32.totalorder %s21, 7
        %s223 = scalar_select %p222, %s21, 7
        %s224 = scalar_lea.vmem %s2, %s223
        %p225 = pneg %p120
        %p226 = pneg %p117
        %p227 = scmp.lt.s32.totalorder %s21, 7
        %s228 = scalar_select %p227, %s21, 7
        %s229 = scalar_lea.vmem %s3, %s228
        %p230 = scmp.lt.s32.totalorder %s21, 7
        %s231 = scalar_select %p230, %s21, 7
        %s232 = scalar_lea.vmem %s2, %s231
        %p233 = scmp.lt.s32.totalorder %s21, 7
        %s234 = scalar_select %p233, %s21, 7
        %s235 = scalar_lea.vmem %s3, %s234
        %v236 = vld [vmem:[%s192] sm:$0xff]
        %v237 = vld [vmem:[%s192 + $0x8] sm:$0xff]
        %v238 = vld [vmem:[%s192 + $0x10] sm:$0xff]
        %v239 = vld [vmem:[%s192 + $0x18] sm:$0xff]
        %v240 = vld [vmem:[%s192 + $0x20] sm:$0xff]
        %v241 = vld [vmem:[%s192 + $0x28] sm:$0xff]
        %v242 = vld [vmem:[%s192 + $0x30] sm:$0xff]
        %v243 = vld [vmem:[%s192 + $0x38] sm:$0xff]
        %v244 = vld [vmem:[%s192 + $0x40] sm:$0xff]
        %v245 = vld [vmem:[%s192 + $0x48] sm:$0xff]
        %v246 = vld [vmem:[%s192 + $0x50] sm:$0xff]
        %v247 = vld [vmem:[%s192 + $0x58] sm:$0xff]
        %v248 = vld [vmem:[%s192 + $0x60] sm:$0xff]
        %v249 = vld [vmem:[%s192 + $0x68] sm:$0xff]
        %v250 = vld [vmem:[%s192 + $0x70] sm:$0xff]
        %v251 = vld [vmem:[%s192 + $0x78] sm:$0xff]
        %v252 = vld [vmem:[%s201] sm:$0xff]
        %v253 = vld [vmem:[%s201 + $0x8] sm:$0xff]
        %v254 = vld [vmem:[%s201 + $0x10] sm:$0xff]
        %v255 = vld [vmem:[%s201 + $0x18] sm:$0xff]
        %v256 = vld [vmem:[%s201 + $0x20] sm:$0xff]
        %v257 = vld [vmem:[%s201 + $0x28] sm:$0xff]
        %v258 = vld [vmem:[%s201 + $0x30] sm:$0xff]
        %v259 = vld [vmem:[%s201 + $0x38] sm:$0xff]
        %v260 = vld [vmem:[%s201 + $0x40] sm:$0xff]
        %v261 = vld [vmem:[%s201 + $0x48] sm:$0xff]
        %v262 = vld [vmem:[%s201 + $0x50] sm:$0xff]
        %v263 = vld [vmem:[%s201 + $0x58] sm:$0xff]
        %v264 = vld [vmem:[%s201 + $0x60] sm:$0xff]
        %v265 = vld [vmem:[%s201 + $0x68] sm:$0xff]
        %v266 = vld [vmem:[%s201 + $0x70] sm:$0xff]
        %v267 = vld [vmem:[%s201 + $0x78] sm:$0xff]
        %v268 = vsub.f32 %v252, 1.0
        %v269 = vsub.f32 %v253, 1.0
        %v270 = vsub.f32 %v254, 1.0
        %v271 = vsub.f32 %v255, 1.0
        %v272 = vsub.f32 %v256, 1.0
        %v273 = vsub.f32 %v257, 1.0
        %v274 = vsub.f32 %v258, 1.0
        %v275 = vsub.f32 %v259, 1.0
        %v276 = vsub.f32 %v260, 1.0
        %v277 = vsub.f32 %v261, 1.0
        %v278 = vsub.f32 %v262, 1.0
        %v279 = vsub.f32 %v263, 1.0
        %v280 = vsub.f32 %v264, 1.0
        %v281 = vsub.f32 %v265, 1.0
        %v282 = vsub.f32 %v266, 1.0
        %v283 = vsub.f32 %v267, 1.0
        %v284 = vmul.f32 %v268, %v268
        %v285 = vmul.f32 %v269, %v269
        %v286 = vmul.f32 %v270, %v270
        %v287 = vmul.f32 %v271, %v271
        %v288 = vmul.f32 %v272, %v272
        %v289 = vmul.f32 %v273, %v273
        %v290 = vmul.f32 %v274, %v274
        %v291 = vmul.f32 %v275, %v275
        %v292 = vmul.f32 %v276, %v276
        %v293 = vmul.f32 %v277, %v277
        %v294 = vmul.f32 %v278, %v278
        %v295 = vmul.f32 %v279, %v279
        %v296 = vmul.f32 %v280, %v280
        %v297 = vmul.f32 %v281, %v281
        %v298 = vmul.f32 %v282, %v282
        %v299 = vmul.f32 %v283, %v283
        %v300 = vmul.f32 %v236, %v284
        %v301 = vmul.f32 %v237, %v285
        %v302 = vmul.f32 %v238, %v286
        %v303 = vmul.f32 %v239, %v287
        %v304 = vmul.f32 %v240, %v288
        %v305 = vmul.f32 %v241, %v289
        %v306 = vmul.f32 %v242, %v290
        %v307 = vmul.f32 %v243, %v291
        %v308 = vmul.f32 %v244, %v292
        %v309 = vmul.f32 %v245, %v293
        %v310 = vmul.f32 %v246, %v294
        %v311 = vmul.f32 %v247, %v295
        %v312 = vmul.f32 %v248, %v296
        %v313 = vmul.f32 %v249, %v297
        %v314 = vmul.f32 %v250, %v298
        %v315 = vmul.f32 %v251, %v299
        %v316 = vsub.f32 1.0, %v236
        %v317 = vsub.f32 1.0, %v237
        %v318 = vsub.f32 1.0, %v238
        %v319 = vsub.f32 1.0, %v239
        %v320 = vsub.f32 1.0, %v240
        %v321 = vsub.f32 1.0, %v241
        %v322 = vsub.f32 1.0, %v242
        %v323 = vsub.f32 1.0, %v243
        %v324 = vsub.f32 1.0, %v244
        %v325 = vsub.f32 1.0, %v245
        %v326 = vsub.f32 1.0, %v246
        %v327 = vsub.f32 1.0, %v247
        %v328 = vsub.f32 1.0, %v248
        %v329 = vsub.f32 1.0, %v249
        %v330 = vsub.f32 1.0, %v250
        %v331 = vsub.f32 1.0, %v251
        %v332 = vmul.f32 %v252, %v252
        %v333 = vmul.f32 %v253, %v253
        %v334 = vmul.f32 %v254, %v254
        %v335 = vmul.f32 %v255, %v255
        %v336 = vmul.f32 %v256, %v256
        %v337 = vmul.f32 %v257, %v257
        %v338 = vmul.f32 %v258, %v258
        %v339 = vmul.f32 %v259, %v259
        %v340 = vmul.f32 %v260, %v260
        %v341 = vmul.f32 %v261, %v261
        %v342 = vmul.f32 %v262, %v262
        %v343 = vmul.f32 %v263, %v263
        %v344 = vmul.f32 %v264, %v264
        %v345 = vmul.f32 %v265, %v265
        %v346 = vmul.f32 %v266, %v266
        %v347 = vmul.f32 %v267, %v267
        %v348 = vmul.f32 %v316, %v332
        %v349 = vmul.f32 %v317, %v333
        %v350 = vmul.f32 %v318, %v334
        %v351 = vmul.f32 %v319, %v335
        %v352 = vmul.f32 %v320, %v336
        %v353 = vmul.f32 %v321, %v337
        %v354 = vmul.f32 %v322, %v338
        %v355 = vmul.f32 %v323, %v339
        %v356 = vmul.f32 %v324, %v340
        %v357 = vmul.f32 %v325, %v341
        %v358 = vmul.f32 %v326, %v342
        %v359 = vmul.f32 %v327, %v343
        %v360 = vmul.f32 %v328, %v344
        %v361 = vmul.f32 %v329, %v345
        %v362 = vmul.f32 %v330, %v346
        %v363 = vmul.f32 %v331, %v347
        %v364 = vadd.f32 %v300, %v348
        %v365 = vadd.f32 %v301, %v349
        %v366 = vadd.f32 %v302, %v350
        %v367 = vadd.f32 %v303, %v351
        %v368 = vadd.f32 %v304, %v352
        %v369 = vadd.f32 %v305, %v353
        %v370 = vadd.f32 %v306, %v354
        %v371 = vadd.f32 %v307, %v355
        %v372 = vadd.f32 %v308, %v356
        %v373 = vadd.f32 %v309, %v357
        %v374 = vadd.f32 %v310, %v358
        %v375 = vadd.f32 %v311, %v359
        %v376 = vadd.f32 %v312, %v360
        %v377 = vadd.f32 %v313, %v361
        %v378 = vadd.f32 %v314, %v362
        %v379 = vadd.f32 %v315, %v363
        %v380 = vadd.f32 %v364, 0.0
        %v381 = vadd.f32 %v365, 0.0
        %v382 = vadd.f32 %v366, 0.0
        %v383 = vadd.f32 %v367, 0.0
        %v384 = vadd.f32 %v368, 0.0
        %v385 = vadd.f32 %v369, 0.0
        %v386 = vadd.f32 %v370, 0.0
        %v387 = vadd.f32 %v371, 0.0
        %v388 = vadd.f32 %v372, 0.0
        %v389 = vadd.f32 %v373, 0.0
        %v390 = vadd.f32 %v374, 0.0
        %v391 = vadd.f32 %v375, 0.0
        %v392 = vadd.f32 %v376, 0.0
        %v393 = vadd.f32 %v377, 0.0
        %v394 = vadd.f32 %v378, 0.0
        %v395 = vadd.f32 %v379, 0.0
        %v396 = vrot.slane %v236, 1
        %v397 = vrot.slane %v237, 1
        %v398 = vrot.slane %v238, 1
        %v399 = vrot.slane %v239, 1
        %v400 = vrot.slane %v240, 1
        %v401 = vrot.slane %v241, 1
        %v402 = vrot.slane %v242, 1
        %v403 = vrot.slane %v243, 1
        %v404 = vrot.slane %v244, 1
        %v405 = vrot.slane %v245, 1
        %v406 = vrot.slane %v246, 1
        %v407 = vrot.slane %v247, 1
        %v408 = vrot.slane %v248, 1
        %v409 = vrot.slane %v249, 1
        %v410 = vrot.slane %v250, 1
        %v411 = vrot.slane %v251, 1
        %v412 = vlaneseq
        %v413 = vshrl.u32 %v412, 7
        %vm414 = vcmp.lt.s32.totalorder %v413, 7
        %v415 = vsel %vm414, %v410, %v411
        %v416 = vsel %vm414, %v409, %v410
        %v417 = vsel %vm414, %v408, %v409
        %v418 = vsel %vm414, %v407, %v408
        %v419 = vsel %vm414, %v406, %v407
        %v420 = vsel %vm414, %v405, %v406
        %v421 = vsel %vm414, %v404, %v405
        %v422 = vsel %vm414, %v403, %v404
        %v423 = vsel %vm414, %v402, %v403
        %v424 = vsel %vm414, %v401, %v402
        %v425 = vsel %vm414, %v400, %v401
        %v426 = vsel %vm414, %v399, %v400
        %v427 = vsel %vm414, %v398, %v399
        %v428 = vsel %vm414, %v397, %v398
        %v429 = vsel %vm414, %v396, %v397
        %v430 = vsel %vm414, %v411, %v396
        %v431 = vrot.slane %v236, 2
        %v432 = vrot.slane %v237, 2
        %v433 = vrot.slane %v238, 2
        %v434 = vrot.slane %v239, 2
        %v435 = vrot.slane %v240, 2
        %v436 = vrot.slane %v241, 2
        %v437 = vrot.slane %v242, 2
        %v438 = vrot.slane %v243, 2
        %v439 = vrot.slane %v244, 2
        %v440 = vrot.slane %v245, 2
        %v441 = vrot.slane %v246, 2
        %v442 = vrot.slane %v247, 2
        %v443 = vrot.slane %v248, 2
        %v444 = vrot.slane %v249, 2
        %v445 = vrot.slane %v250, 2
        %v446 = vrot.slane %v251, 2
        %vm447 = vcmp.lt.s32.totalorder %v413, 6
        %v448 = vsel %vm447, %v445, %v446
        %v449 = vsel %vm447, %v444, %v445
        %v450 = vsel %vm447, %v443, %v444
        %v451 = vsel %vm447, %v442, %v443
        %v452 = vsel %vm447, %v441, %v442
        %v453 = vsel %vm447, %v440, %v441
        %v454 = vsel %vm447, %v439, %v440
        %v455 = vsel %vm447, %v438, %v439
        %v456 = vsel %vm447, %v437, %v438
        %v457 = vsel %vm447, %v436, %v437
        %v458 = vsel %vm447, %v435, %v436
        %v459 = vsel %vm447, %v434, %v435
        %v460 = vsel %vm447, %v433, %v434
        %v461 = vsel %vm447, %v432, %v433
        %v462 = vsel %vm447, %v431, %v432
        %v463 = vsel %vm447, %v446, %v431
        %464 = vrot.lane.b32.xlu0 %v236, 127
        %v465 = vpop.permute.xlu0 %464
        %466 = vrot.lane.b32.xlu0 %v237, 127
        %v467 = vpop.permute.xlu0 %466
        %468 = vrot.lane.b32.xlu0 %v238, 127
        %v469 = vpop.permute.xlu0 %468
        %470 = vrot.lane.b32.xlu0 %v239, 127
        %v471 = vpop.permute.xlu0 %470
        %472 = vrot.lane.b32.xlu0 %v240, 127
        %v473 = vpop.permute.xlu0 %472
        %474 = vrot.lane.b32.xlu0 %v241, 127
        %v475 = vpop.permute.xlu0 %474
        %476 = vrot.lane.b32.xlu0 %v242, 127
        %v477 = vpop.permute.xlu0 %476
        %478 = vrot.lane.b32.xlu0 %v243, 127
        %v479 = vpop.permute.xlu0 %478
        %480 = vrot.lane.b32.xlu0 %v244, 127
        %v481 = vpop.permute.xlu0 %480
        %482 = vrot.lane.b32.xlu0 %v245, 127
        %v483 = vpop.permute.xlu0 %482
        %484 = vrot.lane.b32.xlu0 %v246, 127
        %v485 = vpop.permute.xlu0 %484
        %486 = vrot.lane.b32.xlu0 %v247, 127
        %v487 = vpop.permute.xlu0 %486
        %488 = vrot.lane.b32.xlu0 %v248, 127
        %v489 = vpop.permute.xlu0 %488
        %490 = vrot.lane.b32.xlu0 %v249, 127
        %v491 = vpop.permute.xlu0 %490
        %492 = vrot.lane.b32.xlu0 %v250, 127
        %v493 = vpop.permute.xlu0 %492
        %494 = vrot.lane.b32.xlu0 %v251, 127
        %v495 = vpop.permute.xlu0 %494
        %496 = vrot.lane.b32.xlu0 %v236, 126
        %v497 = vpop.permute.xlu0 %496
        %498 = vrot.lane.b32.xlu0 %v237, 126
        %v499 = vpop.permute.xlu0 %498
        %500 = vrot.lane.b32.xlu0 %v238, 126
        %v501 = vpop.permute.xlu0 %500
        %502 = vrot.lane.b32.xlu0 %v239, 126
        %v503 = vpop.permute.xlu0 %502
        %504 = vrot.lane.b32.xlu0 %v240, 126
        %v505 = vpop.permute.xlu0 %504
        %506 = vrot.lane.b32.xlu0 %v241, 126
        %v507 = vpop.permute.xlu0 %506
        %508 = vrot.lane.b32.xlu0 %v242, 126
        %v509 = vpop.permute.xlu0 %508
        %510 = vrot.lane.b32.xlu0 %v243, 126
        %v511 = vpop.permute.xlu0 %510
        %512 = vrot.lane.b32.xlu0 %v244, 126
        %v513 = vpop.permute.xlu0 %512
        %514 = vrot.lane.b32.xlu0 %v245, 126
        %v515 = vpop.permute.xlu0 %514
        %516 = vrot.lane.b32.xlu0 %v246, 126
        %v517 = vpop.permute.xlu0 %516
        %518 = vrot.lane.b32.xlu0 %v247, 126
        %v519 = vpop.permute.xlu0 %518
        %520 = vrot.lane.b32.xlu0 %v248, 126
        %v521 = vpop.permute.xlu0 %520
        %522 = vrot.lane.b32.xlu0 %v249, 126
        %v523 = vpop.permute.xlu0 %522
        %524 = vrot.lane.b32.xlu0 %v250, 126
        %v525 = vpop.permute.xlu0 %524
        %526 = vrot.lane.b32.xlu0 %v251, 126
        %v527 = vpop.permute.xlu0 %526
        %v528 = vsub.f32 %v462, %v429
        %v529 = vsub.f32 %v461, %v428
        %v530 = vsub.f32 %v460, %v427
        %v531 = vsub.f32 %v459, %v426
        %v532 = vsub.f32 %v458, %v425
        %v533 = vsub.f32 %v457, %v424
        %v534 = vsub.f32 %v456, %v423
        %v535 = vsub.f32 %v455, %v422
        %v536 = vsub.f32 %v454, %v421
        %v537 = vsub.f32 %v453, %v420
        %v538 = vsub.f32 %v452, %v419
        %v539 = vsub.f32 %v451, %v418
        %v540 = vsub.f32 %v450, %v417
        %v541 = vsub.f32 %v449, %v416
        %v542 = vsub.f32 %v448, %v415
        %v543 = vsub.f32 %v463, %v430
        %v544 = vsub.f32 %v497, %v465
        %v545 = vsub.f32 %v499, %v467
        %v546 = vsub.f32 %v501, %v469
        %v547 = vsub.f32 %v503, %v471
        %v548 = vsub.f32 %v505, %v473
        %v549 = vsub.f32 %v507, %v475
        %v550 = vsub.f32 %v509, %v477
        %v551 = vsub.f32 %v511, %v479
        %v552 = vsub.f32 %v513, %v481
        %v553 = vsub.f32 %v515, %v483
        %v554 = vsub.f32 %v517, %v485
        %v555 = vsub.f32 %v519, %v487
        %v556 = vsub.f32 %v521, %v489
        %v557 = vsub.f32 %v523, %v491
        %v558 = vsub.f32 %v525, %v493
        %v559 = vsub.f32 %v527, %v495
        %v560 = vmul.f32 %v528, %v528
        %v561 = vmul.f32 %v529, %v529
        %v562 = vmul.f32 %v530, %v530
        %v563 = vmul.f32 %v531, %v531
        %v564 = vmul.f32 %v532, %v532
        %v565 = vmul.f32 %v533, %v533
        %v566 = vmul.f32 %v534, %v534
        %v567 = vmul.f32 %v535, %v535
        %v568 = vmul.f32 %v536, %v536
        %v569 = vmul.f32 %v537, %v537
        %v570 = vmul.f32 %v538, %v538
        %v571 = vmul.f32 %v539, %v539
        %v572 = vmul.f32 %v540, %v540
        %v573 = vmul.f32 %v541, %v541
        %v574 = vmul.f32 %v542, %v542
        %v575 = vmul.f32 %v543, %v543
        %v576 = vmul.f32 %v544, %v544
        %v577 = vmul.f32 %v545, %v545
        %v578 = vmul.f32 %v546, %v546
        %v579 = vmul.f32 %v547, %v547
        %v580 = vmul.f32 %v548, %v548
        %v581 = vmul.f32 %v549, %v549
        %v582 = vmul.f32 %v550, %v550
        %v583 = vmul.f32 %v551, %v551
        %v584 = vmul.f32 %v552, %v552
        %v585 = vmul.f32 %v553, %v553
        %v586 = vmul.f32 %v554, %v554
        %v587 = vmul.f32 %v555, %v555
        %v588 = vmul.f32 %v556, %v556
        %v589 = vmul.f32 %v557, %v557
        %v590 = vmul.f32 %v558, %v558
        %v591 = vmul.f32 %v559, %v559
        %v592 = vadd.f32 %v560, %v576
        %v593 = vadd.f32 %v561, %v577
        %v594 = vadd.f32 %v562, %v578
        %v595 = vadd.f32 %v563, %v579
        %v596 = vadd.f32 %v564, %v580
        %v597 = vadd.f32 %v565, %v581
        %v598 = vadd.f32 %v566, %v582
        %v599 = vadd.f32 %v567, %v583
        %v600 = vadd.f32 %v568, %v584
        %v601 = vadd.f32 %v569, %v585
        %v602 = vadd.f32 %v570, %v586
        %v603 = vadd.f32 %v571, %v587
        %v604 = vadd.f32 %v572, %v588
        %v605 = vadd.f32 %v573, %v589
        %v606 = vadd.f32 %v574, %v590
        %v607 = vadd.f32 %v575, %v591
        %v608 = vadd.f32 %v592, 1e-08
        %v609 = vadd.f32 %v593, 1e-08
        %v610 = vadd.f32 %v594, 1e-08
        %v611 = vadd.f32 %v595, 1e-08
        %v612 = vadd.f32 %v596, 1e-08
        %v613 = vadd.f32 %v597, 1e-08
        %v614 = vadd.f32 %v598, 1e-08
        %v615 = vadd.f32 %v599, 1e-08
        %v616 = vadd.f32 %v600, 1e-08
        %v617 = vadd.f32 %v601, 1e-08
        %v618 = vadd.f32 %v602, 1e-08
        %v619 = vadd.f32 %v603, 1e-08
        %v620 = vadd.f32 %v604, 1e-08
        %v621 = vadd.f32 %v605, 1e-08
        %v622 = vadd.f32 %v606, 1e-08
        %v623 = vadd.f32 %v607, 1e-08
        %v624 = vrsqrt.pop %v608
        %v625 = vmul.f32 %v608, %v624
        %vm626 = vcmp.eq.f32.partialorder %v608, inf
        %v627 = vsel %vm626, %v608, %v625
        %vm628 = vcmp.eq.f32.partialorder %v608, 0.0
        %v629 = vand.u32 %v608, 2147483648
        %v630 = vsel %vm628, %v629, %v627
        %v631 = vrsqrt.pop %v609
        %v632 = vmul.f32 %v609, %v631
        %vm633 = vcmp.eq.f32.partialorder %v609, inf
        %v634 = vsel %vm633, %v609, %v632
        %vm635 = vcmp.eq.f32.partialorder %v609, 0.0
        %v636 = vand.u32 %v609, 2147483648
        %v637 = vsel %vm635, %v636, %v634
        %v638 = vrsqrt.pop %v610
        %v639 = vmul.f32 %v610, %v638
        %vm640 = vcmp.eq.f32.partialorder %v610, inf
        %v641 = vsel %vm640, %v610, %v639
        %vm642 = vcmp.eq.f32.partialorder %v610, 0.0
        %v643 = vand.u32 %v610, 2147483648
        %v644 = vsel %vm642, %v643, %v641
        %v645 = vrsqrt.pop %v611
        %v646 = vmul.f32 %v611, %v645
        %vm647 = vcmp.eq.f32.partialorder %v611, inf
        %v648 = vsel %vm647, %v611, %v646
        %vm649 = vcmp.eq.f32.partialorder %v611, 0.0
        %v650 = vand.u32 %v611, 2147483648
        %v651 = vsel %vm649, %v650, %v648
        %v652 = vrsqrt.pop %v612
        %v653 = vmul.f32 %v612, %v652
        %vm654 = vcmp.eq.f32.partialorder %v612, inf
        %v655 = vsel %vm654, %v612, %v653
        %vm656 = vcmp.eq.f32.partialorder %v612, 0.0
        %v657 = vand.u32 %v612, 2147483648
        %v658 = vsel %vm656, %v657, %v655
        %v659 = vrsqrt.pop %v613
        %v660 = vmul.f32 %v613, %v659
        %vm661 = vcmp.eq.f32.partialorder %v613, inf
        %v662 = vsel %vm661, %v613, %v660
        %vm663 = vcmp.eq.f32.partialorder %v613, 0.0
        %v664 = vand.u32 %v613, 2147483648
        %v665 = vsel %vm663, %v664, %v662
        %v666 = vrsqrt.pop %v614
        %v667 = vmul.f32 %v614, %v666
        %vm668 = vcmp.eq.f32.partialorder %v614, inf
        %v669 = vsel %vm668, %v614, %v667
        %vm670 = vcmp.eq.f32.partialorder %v614, 0.0
        %v671 = vand.u32 %v614, 2147483648
        %v672 = vsel %vm670, %v671, %v669
        %v673 = vrsqrt.pop %v615
        %v674 = vmul.f32 %v615, %v673
        %vm675 = vcmp.eq.f32.partialorder %v615, inf
        %v676 = vsel %vm675, %v615, %v674
        %vm677 = vcmp.eq.f32.partialorder %v615, 0.0
        %v678 = vand.u32 %v615, 2147483648
        %v679 = vsel %vm677, %v678, %v676
        %v680 = vrsqrt.pop %v616
        %v681 = vmul.f32 %v616, %v680
        %vm682 = vcmp.eq.f32.partialorder %v616, inf
        %v683 = vsel %vm682, %v616, %v681
        %vm684 = vcmp.eq.f32.partialorder %v616, 0.0
        %v685 = vand.u32 %v616, 2147483648
        %v686 = vsel %vm684, %v685, %v683
        %v687 = vrsqrt.pop %v617
        %v688 = vmul.f32 %v617, %v687
        %vm689 = vcmp.eq.f32.partialorder %v617, inf
        %v690 = vsel %vm689, %v617, %v688
        %vm691 = vcmp.eq.f32.partialorder %v617, 0.0
        %v692 = vand.u32 %v617, 2147483648
        %v693 = vsel %vm691, %v692, %v690
        %v694 = vrsqrt.pop %v618
        %v695 = vmul.f32 %v618, %v694
        %vm696 = vcmp.eq.f32.partialorder %v618, inf
        %v697 = vsel %vm696, %v618, %v695
        %vm698 = vcmp.eq.f32.partialorder %v618, 0.0
        %v699 = vand.u32 %v618, 2147483648
        %v700 = vsel %vm698, %v699, %v697
        %v701 = vrsqrt.pop %v619
        %v702 = vmul.f32 %v619, %v701
        %vm703 = vcmp.eq.f32.partialorder %v619, inf
        %v704 = vsel %vm703, %v619, %v702
        %vm705 = vcmp.eq.f32.partialorder %v619, 0.0
        %v706 = vand.u32 %v619, 2147483648
        %v707 = vsel %vm705, %v706, %v704
        %v708 = vrsqrt.pop %v620
        %v709 = vmul.f32 %v620, %v708
        %vm710 = vcmp.eq.f32.partialorder %v620, inf
        %v711 = vsel %vm710, %v620, %v709
        %vm712 = vcmp.eq.f32.partialorder %v620, 0.0
        %v713 = vand.u32 %v620, 2147483648
        %v714 = vsel %vm712, %v713, %v711
        %v715 = vrsqrt.pop %v621
        %v716 = vmul.f32 %v621, %v715
        %vm717 = vcmp.eq.f32.partialorder %v621, inf
        %v718 = vsel %vm717, %v621, %v716
        %vm719 = vcmp.eq.f32.partialorder %v621, 0.0
        %v720 = vand.u32 %v621, 2147483648
        %v721 = vsel %vm719, %v720, %v718
        %v722 = vrsqrt.pop %v622
        %v723 = vmul.f32 %v622, %v722
        %vm724 = vcmp.eq.f32.partialorder %v622, inf
        %v725 = vsel %vm724, %v622, %v723
        %vm726 = vcmp.eq.f32.partialorder %v622, 0.0
        %v727 = vand.u32 %v622, 2147483648
        %v728 = vsel %vm726, %v727, %v725
        %v729 = vrsqrt.pop %v623
        %v730 = vmul.f32 %v623, %v729
        %vm731 = vcmp.eq.f32.partialorder %v623, inf
        %v732 = vsel %vm731, %v623, %v730
        %vm733 = vcmp.eq.f32.partialorder %v623, 0.0
        %v734 = vand.u32 %v623, 2147483648
        %v735 = vsel %vm733, %v734, %v732
        %v736 = vadd.f32 %v630, 0.0
        %v737 = vadd.f32 %v637, 0.0
        %v738 = vadd.f32 %v644, 0.0
        %v739 = vadd.f32 %v651, 0.0
        %v740 = vadd.f32 %v658, 0.0
        %v741 = vadd.f32 %v665, 0.0
        %v742 = vadd.f32 %v672, 0.0
        %v743 = vadd.f32 %v679, 0.0
        %v744 = vadd.f32 %v686, 0.0
        %v745 = vadd.f32 %v693, 0.0
        %v746 = vadd.f32 %v700, 0.0
        %v747 = vadd.f32 %v707, 0.0
        %v748 = vadd.f32 %v714, 0.0
        %v749 = vadd.f32 %v721, 0.0
        %v750 = vadd.f32 %v728, 0.0
        %v751 = vadd.f32 %v735, 0.0
        %v752 = vadd.f32 %v380, %v381
        %v753 = vadd.f32 %v752, %v382
        %v754 = vadd.f32 %v753, %v383
        %v755 = vadd.f32 %v754, %v384
        %v756 = vadd.f32 %v755, %v385
        %v757 = vadd.f32 %v756, %v386
        %v758 = vadd.f32 %v757, %v387
        %v759 = vadd.f32 %v758, %v388
        %v760 = vadd.f32 %v759, %v389
        %v761 = vadd.f32 %v760, %v390
        %v762 = vadd.f32 %v761, %v391
        %v763 = vadd.f32 %v762, %v392
        %v764 = vadd.f32 %v763, %v393
        %v765 = vadd.f32 %v764, %v394
        %v766 = vadd.f32 %v765, %v395
        %767 = vadd.xlane.f32.xlu0 %v766
        %v768 = vpop.xlane.xlu0 %767
        %v769 = vrot.slane %v768, 4
        %v770 = vadd.f32 %v768, %v769
        %v771 = vrot.slane %v770, 2
        %v772 = vadd.f32 %v770, %v771
        %v773 = vrot.slane %v772, 1
        %v774 = vadd.f32 %v772, %v773
        %s775 = vtos %v774
        %v776 = vadd.s32 %v413, 8
        %v777 = vadd.s32 %v413, 16
        %v778 = vadd.s32 %v413, 24
        %v779 = vadd.s32 %v413, 32
        %v780 = vadd.s32 %v413, 40
        %v781 = vadd.s32 %v413, 48
        %v782 = vadd.s32 %v413, 56
        %v783 = vadd.s32 %v413, 64
        %v784 = vadd.s32 %v413, 72
        %v785 = vadd.s32 %v413, 80
        %v786 = vadd.s32 %v413, 88
        %v787 = vadd.s32 %v413, 96
        %v788 = vadd.s32 %v413, 104
        %v789 = vadd.s32 %v413, 112
        %v790 = vadd.s32 %v413, 120
        %v791 = vlaneseq
        %v792 = vand.u32 %v791, 127
        %vm793 = vcmp.lt.s32.totalorder %v413, 126
        %vm794 = vcmp.lt.s32.totalorder %v776, 126
        %vm795 = vcmp.lt.s32.totalorder %v777, 126
        %vm796 = vcmp.lt.s32.totalorder %v778, 126
        %vm797 = vcmp.lt.s32.totalorder %v779, 126
        %vm798 = vcmp.lt.s32.totalorder %v780, 126
        %vm799 = vcmp.lt.s32.totalorder %v781, 126
        %vm800 = vcmp.lt.s32.totalorder %v782, 126
        %vm801 = vcmp.lt.s32.totalorder %v783, 126
        %vm802 = vcmp.lt.s32.totalorder %v784, 126
        %vm803 = vcmp.lt.s32.totalorder %v785, 126
        %vm804 = vcmp.lt.s32.totalorder %v786, 126
        %vm805 = vcmp.lt.s32.totalorder %v787, 126
        %vm806 = vcmp.lt.s32.totalorder %v788, 126
        %vm807 = vcmp.lt.s32.totalorder %v789, 126
        %vm808 = vcmp.lt.s32.totalorder %v790, 126
        %vm809 = vcmp.lt.s32.totalorder %v792, 126
        %vm810 = vmand %vm793, %vm809
        %vm811 = vmand %vm794, %vm809
        %vm812 = vmand %vm795, %vm809
        %vm813 = vmand %vm796, %vm809
        %vm814 = vmand %vm797, %vm809
        %vm815 = vmand %vm798, %vm809
        %vm816 = vmand %vm799, %vm809
        %vm817 = vmand %vm800, %vm809
        %vm818 = vmand %vm801, %vm809
        %vm819 = vmand %vm802, %vm809
        %vm820 = vmand %vm803, %vm809
        %vm821 = vmand %vm804, %vm809
        %vm822 = vmand %vm805, %vm809
        %vm823 = vmand %vm806, %vm809
        %vm824 = vmand %vm807, %vm809
        %vm825 = vmand %vm808, %vm809
        %v826 = vsel %vm810, %v736, 0.0
        %v827 = vsel %vm811, %v737, 0.0
        %v828 = vsel %vm812, %v738, 0.0
        %v829 = vsel %vm813, %v739, 0.0
        %v830 = vsel %vm814, %v740, 0.0
        %v831 = vsel %vm815, %v741, 0.0
        %v832 = vsel %vm816, %v742, 0.0
        %v833 = vsel %vm817, %v743, 0.0
        %v834 = vsel %vm818, %v744, 0.0
        %v835 = vsel %vm819, %v745, 0.0
        %v836 = vsel %vm820, %v746, 0.0
        %v837 = vsel %vm821, %v747, 0.0
        %v838 = vsel %vm822, %v748, 0.0
        %v839 = vsel %vm823, %v749, 0.0
        %v840 = vsel %vm824, %v750, 0.0
        %v841 = vsel %vm825, %v751, 0.0
        %v842 = vadd.f32 %v826, %v827
        %v843 = vadd.f32 %v842, %v828
        %v844 = vadd.f32 %v843, %v829
        %v845 = vadd.f32 %v844, %v830
        %v846 = vadd.f32 %v845, %v831
        %v847 = vadd.f32 %v846, %v832
        %v848 = vadd.f32 %v847, %v833
        %v849 = vadd.f32 %v848, %v834
        %v850 = vadd.f32 %v849, %v835
        %v851 = vadd.f32 %v850, %v836
        %v852 = vadd.f32 %v851, %v837
        %v853 = vadd.f32 %v852, %v838
        %v854 = vadd.f32 %v853, %v839
        %v855 = vadd.f32 %v854, %v840
        %v856 = vadd.f32 %v855, %v841
        %857 = vadd.xlane.f32.xlu0 %v856
        %v858 = vpop.xlane.xlu0 %857
        %v859 = vrot.slane %v858, 4
        %v860 = vadd.f32 %v858, %v859
        %v861 = vrot.slane %v860, 2
        %v862 = vadd.f32 %v860, %v861
        %v863 = vrot.slane %v862, 1
        %v864 = vadd.f32 %v862, %v863
        %s865 = vtos %v864
        %v866 = vstv %s865
        %867 = vst [vmem:[%s232] sm:$0x1] %v866
        %v868 = vstv %s775
        %869 = vst [vmem:[%s235] sm:$0x1] %v868
        %p870 = scmp.lt.s32.totalorder %s21, 7
        %s871 = scalar_select %p870, %s21, 7
        %s872 = scalar_lea.vmem %s2, %s871
        %p873 = scmp.lt.s32.totalorder %s21, 7
        %s874 = scalar_select %p873, %s21, 7
        %s875 = scalar_lea.vmem %s3, %s874
        // Predicated region
        $region37: #{contour_loss.1} parent=27 // pred_check
          %p876 = pneg %p91
        $region38: #{contour_loss.1} parent=27 // pred_check_branch
          %878 = sbr.rel (%p876) target = $region40
        $region39: #{contour_loss.1} parent=27 // pred_region
          _
        $region40: #{contour_loss.1} parent=27 // pred_fallthru
          _
        // Predicated region
        $region41: #{contour_loss.1} parent=27 // pred_check
          %p879 = pneg %p117
        $region42: #{contour_loss.1} parent=27 // pred_check_branch
          %881 = sbr.rel (%p879) target = $region44
        $region43: #{contour_loss.1} parent=27 // pred_region
          _
        $region44: #{contour_loss.1} parent=27 // pred_fallthru
          _
      $region28: #{contour_loss.1} parent=5 // pred_fallthru
        _
      %p882 = scmp.le.s32.totalorder 2, %s16
      // Predicated region
      $region45: #{contour_loss.1} parent=5 // pred_check
        %p883 = pneg %p882
      $region46: #{contour_loss.1} parent=5 // pred_check_branch
        %885 = sbr.rel (%p883) target = $region48
      $region47: #{contour_loss.1} parent=5 // pred_region
        %s886 = ssub.s32 %s16, 2
        // Predicated region
        $region49: #{contour_loss.1} parent=47 // pred_check
          %p887 = pneg %p97
        $region50: #{contour_loss.1} parent=47 // pred_check_branch
          %889 = sbr.rel (%p887) target = $region52
        $region51: #{contour_loss.1} parent=47 // pred_region
          %p890 = scmp.lt.s32.totalorder %s22, 7
          %s891 = scalar_select %p890, %s22, 7
          %s892 = scalar_lea.vmem %s2, %s891
        $region52: #{contour_loss.1} parent=47 // pred_fallthru
          _
        // Predicated region
        $region53: #{contour_loss.1} parent=47 // pred_check
          %p893 = pneg %p123
        $region54: #{contour_loss.1} parent=47 // pred_check_branch
          %895 = sbr.rel (%p893) target = $region56
        $region55: #{contour_loss.1} parent=47 // pred_region
          %p896 = scmp.lt.s32.totalorder %s22, 7
          %s897 = scalar_select %p896, %s22, 7
          %s898 = scalar_lea.vmem %s3, %s897
        $region56: #{contour_loss.1} parent=47 // pred_fallthru
          _
      $region48: #{contour_loss.1} parent=5 // pred_fallthru
        _
    $region6: #{contour_loss.1} parent=1 // loop_footer
      %s20 = sadd.s32 1, %s16
    $region7: #{contour_loss.1} parent=1 // loop_footer_branch
      %15 = sbr.rel target = $region3
    $region8: #{contour_loss.1} parent=1 // loop_exit
      _
    %899 = vsyncpa [#allocation3], 1
    %s900 = scalar_lea.sflag [#allocation3], 1
    %901 = vsyncpa %s900, 1
    %902 = vsyncpa [#allocation5], 1
    %s903 = scalar_lea.sflag [#allocation5], 1
    %904 = vsyncpa %s903, 1

</llo_original>
